<compile_context>
chip_gen: v7x
topology: tpu7x:2x2x1
jax: 0.10.0
libtpu: 0.0.40
codegen_flags: <defaults>
</compile_context>

<pallas_src>
import math

import numpy as np
import jax
import jax.numpy as jnp
from jax.experimental import pallas as pl
from jax.experimental.pallas import tpu as pltpu


def _round_up(x, m):
    return ((x + m - 1) // m) * m


def _vmem_capacity_bytes():
    try:
        info = pltpu.get_tpu_info()
        cap = getattr(info, "vmem_capacity_bytes", None)
        if cap:
            return int(cap)
    except Exception:
        pass
    return 64 * 1024 * 1024  # conservative default (v7x per-TensorCore VMEM)


def _one_hot_embed_kernel(x_ref, gather_ref, target_ref, o_ref):
    # x_ref:      (tile_rows, G*C)     packed input values (bf16 or f32)
    # gather_ref: (G*C, tile_L)        constant 0/1 matrix, VMEM-resident
    # target_ref: (1, tile_L)          constant (local_index + 1), f32
    # o_ref:      (tile_rows, tile_L)  packed nullable-one-hot output
    vals = jnp.dot(x_ref[...], gather_ref[...],
                   preferred_element_type=jnp.float32)
    o_ref[...] = (vals == target_ref[...]).astype(o_ref.dtype)


def one_hot_embedding(x, component_sizes, *, out_dtype=jnp.float32):
    """x: int array [..., len(component_sizes)] -> [..., sum(sizes)] (out_dtype)."""
    component_sizes = tuple(int(s) for s in component_sizes)
    C = len(component_sizes)
    total = sum(component_sizes)
    assert x.shape[-1] == C, "last dim of x must equal number of components"
    # Exact float equality compare requires exactly representable values.
    assert max(component_sizes) < (1 << 24)

    lead = x.shape[:-1]
    n = 1
    for d in lead:
        n *= d

    # Lane-dense packing factor: smallest G with (G * total) % 128 == 0.
    G = 128 // math.gcd(total, 128)
    L = G * total
    GC = G * C

    # bf16 MXU path is exact for integer values <= 256; otherwise stay in f32.
    in_dtype = jnp.bfloat16 if max(component_sizes) <= 256 else jnp.float32
    in_bytes = jnp.dtype(in_dtype).itemsize
    out_bytes = jnp.dtype(out_dtype).itemsize

    # ---- generation-aware VMEM budgets ----
    vmem_phys = _vmem_capacity_bytes()
    small_vmem = vmem_phys <= 96 * (1 << 20)            # v7x-class (64 MiB/TC)
    vmem_limit = int(min(vmem_phys * 3 // 4, 100 * (1 << 20)))
    out_tile_budget = (8 if small_vmem else 16) * (1 << 20)

    # Column tiling: keep the (double-buffered) gather constant well under budget.
    gather_budget = vmem_limit // 8
    tile_L = L
    if 2 * GC * L * in_bytes > gather_budget:
        tile_L = max(128, (gather_budget // (2 * GC * in_bytes)) // 128 * 128)
        tile_L = min(tile_L, L)
    grid_cols = pl.cdiv(L, tile_L)

    # Row tiling: as many packed rows per step as the output-tile budget allows.
    n_pad = _round_up(n, 8 * G)                          # tiny pad (< 8*G rows)
    packed_rows = n_pad // G                             # multiple of 8
    rows_from_budget = max(8, (out_tile_budget // (tile_L * out_bytes)) // 8 * 8)
    tile_rows = min(packed_rows, rows_from_budget)
    # v7x megacore: keep at least 2 row blocks when there is enough work.
    if small_vmem and tile_rows == packed_rows and packed_rows >= 64:
        tile_rows = _round_up(pl.cdiv(packed_rows, 2), 8)
    grid_rows = pl.cdiv(packed_rows, tile_rows)

    # ---- pack input ----
    x2 = x.reshape(n, C)
    if n_pad != n:
        # Padded rows are 0 -> all-zero output rows -> sliced off below.
        x2 = jnp.pad(x2, ((0, n_pad - n), (0, 0)))
    x2 = x2.astype(in_dtype).reshape(packed_rows, GC)    # free row-major reshape

    # ---- host-side constants (built once with numpy, not per grid step) ----
    comp = np.concatenate(
        [np.full(s, i, np.int64) for i, s in enumerate(component_sizes)])
    local = np.concatenate(
        [np.arange(s, dtype=np.int64) for s in component_sizes])
    g_idx = np.repeat(np.arange(G, dtype=np.int64), total)          # (L,)
    src = g_idx * C + np.tile(comp, G)                               # (L,)
    gather_np = (np.arange(GC)[:, None] == src[None, :]).astype(np.float32)
    target_np = (np.tile(local, G) + 1).astype(np.float32)[None, :]
    gather = jnp.asarray(gather_np, dtype=in_dtype)                  # (GC, L)
    target = jnp.asarray(target_np, dtype=jnp.float32)               # (1, L)

    out = pl.pallas_call(
        _one_hot_embed_kernel,
        out_shape=jax.ShapeDtypeStruct((packed_rows, L), out_dtype),
        grid_spec=pltpu.PrefetchScalarGridSpec(
            num_scalar_prefetch=0,
            grid=(grid_rows, grid_cols),
            in_specs=[
                pl.BlockSpec((tile_rows, GC), lambda i, j: (i, 0)),
                pl.BlockSpec((GC, tile_L), lambda i, j: (0, j)),
                pl.BlockSpec((1, tile_L), lambda i, j: (0, j)),
            ],
            out_specs=pl.BlockSpec((tile_rows, tile_L), lambda i, j: (i, j)),
        ),
        compiler_params=pltpu.CompilerParams(
            dimension_semantics=("parallel", "parallel"),
            vmem_limit_bytes=vmem_limit),
        cost_estimate=pl.CostEstimate(
            flops=2 * packed_rows * GC * L,
            transcendentals=0,
            bytes_accessed=(packed_rows * GC * in_bytes
                            + GC * L * in_bytes
                            + packed_rows * L * out_bytes),
        ),
    )(x2, gather, target)

    # Undo the lane packing (free row-major reshape), drop pad rows.
    out = out.reshape(n_pad, total)
    if n_pad != n:
        out = out[:n]
    # TODO(synk): huge G*C (many components at coprime widths) would need K-dim
    # tiling with an accumulator; not needed for realistic component counts.
    return out.reshape(*lead, total)


def _reference(x, component_sizes):
    # Pure-JAX reference mirroring nullable_one_hot + concat.
    parts = []
    for i, s in enumerate(component_sizes):
        oh = jax.nn.one_hot(x[..., i], s + 1, dtype=jnp.float32)[..., 1:]
        parts.append(oh)
    return jnp.concatenate(parts, axis=-1)


if __name__ == "__main__":
    component_sizes = (3, 5, 8)           # output_size = 16
    batch, seq = 2, 8                     # x: (2, 8, 3)

    key = jax.random.PRNGKey(0)
    keys = jax.random.split(key, len(component_sizes))
    cols = [
        jax.random.randint(k, (batch, seq), 0, s + 1, dtype=jnp.int32)
        for k, s in zip(keys, component_sizes)
    ]
    x = jnp.stack(cols, axis=-1)          # int32, values in [0, s]

    out = jax.block_until_ready(one_hot_embedding(x, component_sizes))
    ref = _reference(x, component_sizes)

    assert out.shape == (batch, seq, sum(component_sizes))
    assert out.dtype == jnp.float32
    assert bool(jnp.all(out == ref))

    print("KERNEL_OK")
</pallas_src>

<mosaic_0001>
module attributes {stable_mosaic.version = 11 : i64} {
  func.func @_one_hot_embed_kernel(%arg0: i32, %arg1: i32, %arg2: memref<8x24xbf16, #tpu.memory_space<vmem>>, %arg3: memref<24x128xbf16, #tpu.memory_space<vmem>>, %arg4: memref<1x128xf32, #tpu.memory_space<vmem>>, %arg5: memref<8x128xf32, #tpu.memory_space<vmem>>) attributes {dimension_semantics = [#tpu.dimension_semantics<parallel>, #tpu.dimension_semantics<parallel>], iteration_bounds = array<i64: 1, 1>, scalar_prefetch = 0 : i64, scratch_operands = 0 : i64, tpu.core_type = #tpu.core_type<tc>, window_params = [{transform_indices = @transform_0, window_bounds = array<i64: 8, 24>}, {transform_indices = @transform_1, window_bounds = array<i64: 24, 128>}, {transform_indices = @transform_2, window_bounds = array<i64: 1, 128>}, {transform_indices = @transform_3, window_bounds = array<i64: 8, 128>}]} {
    %c0 = arith.constant 0 : index
    %c0_0 = arith.constant 0 : index
    %0 = vector.load %arg2[%c0, %c0_0] : memref<8x24xbf16, #tpu.memory_space<vmem>>, vector<8x24xbf16>
    %c0_1 = arith.constant 0 : index
    %c0_2 = arith.constant 0 : index
    %1 = vector.load %arg3[%c0_1, %c0_2] : memref<24x128xbf16, #tpu.memory_space<vmem>>, vector<24x128xbf16>
    %cst = arith.constant dense<0.000000e+00> : vector<8x128xf32>
    %2 = tpu.matmul %0, %1, %cst {dimension_numbers = #tpu.dot_dimension_numbers<[1], [0], [0], [1], [0, 0, 1, 1], [], []>} : vector<8x24xbf16>, vector<24x128xbf16>, vector<8x128xf32> -> vector<8x128xf32>
    %c0_3 = arith.constant 0 : index
    %c0_4 = arith.constant 0 : index
    %3 = vector.load %arg4[%c0_3, %c0_4] : memref<1x128xf32, #tpu.memory_space<vmem>>, vector<1x128xf32>
    %4 = vector.broadcast %3 : vector<1x128xf32> to vector<8x128xf32>
    %5 = arith.cmpf oeq, %2, %4 : vector<8x128xf32>
    %6 = arith.extui %5 : vector<8x128xi1> to vector<8x128xi32>
    %7 = arith.sitofp %6 : vector<8x128xi32> to vector<8x128xf32>
    %c0_5 = arith.constant 0 : index
    %c0_6 = arith.constant 0 : index
    %8 = vector.load %arg5[%c0_5, %c0_6] : memref<8x128xf32, #tpu.memory_space<vmem>>, vector<8x128xf32>
    tpu.vector_store %arg5[%c0_5, %c0_6], %7 {strides = array<i32>} : memref<8x128xf32, #tpu.memory_space<vmem>>, vector<8x128xf32>,
    return
  }
  func.func @transform_0(%arg0: i32, %arg1: i32) -> (i32, i32) {
    %c0_i32 = arith.constant 0 : i32
    %c0_i32_0 = arith.constant 0 : i32
    return %arg0, %c0_i32 : i32, i32
  }
  func.func @transform_1(%arg0: i32, %arg1: i32) -> (i32, i32) {
    %c0_i32 = arith.constant 0 : i32
    %c0_i32_0 = arith.constant 0 : i32
    return %c0_i32, %arg1 : i32, i32
  }
  func.func @transform_2(%arg0: i32, %arg1: i32) -> (i32, i32) {
    %c0_i32 = arith.constant 0 : i32
    %c0_i32_0 = arith.constant 0 : i32
    return %c0_i32, %arg1 : i32, i32
  }
  func.func @transform_3(%arg0: i32, %arg1: i32) -> (i32, i32) {
    %c0_i32 = arith.constant 0 : i32
    return %arg0, %arg1 : i32, i32
  }
}

</mosaic_0001>

<llo_original>
// kernel: tpu_custom_call.1
$region0: #{tpu_custom_call.1}
  #allocation0 [shape = 'u32[]', space=smem, size = 0x4, offset = 0x4, fixed_abs, tag = 'smem constant byte address 0x4 - core index']
  #allocation1 [shape = 'u32[144,128]{1,0:T(1,128)}', space=vmem, size = 0x12000, scoped, tag = 'internal scratch']
  %s0 = inlined_call_operand.hbm [shape: bf16[8,24], index: 0, kind: input, shape index: {}]
  %s1 = inlined_call_operand.hbm [shape: bf16[24,128], index: 1, kind: input, shape index: {}]
  %s2 = inlined_call_operand.vmem [shape: f32[1,128], index: 2, kind: input, shape index: {}]
  %s3 = inlined_call_operand.hbm [shape: f32[8,128], index: 3, kind: output, shape index: {}]
  %s4 = sld [smem:[#allocation0]]
  $region30: #{tpu_custom_call.1} parent=0
    _
  %s6 = ssub.s32 1, %s4
  %s7 = scalar_select 0, %s6, %s4
  $region1: #{tpu_custom_call.1} parent=0
    #allocation2 [shape = 'u8[2048]{0}', space=vmem, size = 0x800, scoped, tag = 'input window, operand 0, single buffered']
    #allocation3 [shape = 's32[1]{0}', space=sflag, size = 0x4, scoped, tag = 'scoped memory for tpu_custom_call.1']
    #allocation4 [shape = 's32[1]{0}', space=sflag, size = 0x4, scoped, tag = 'scoped memory for tpu_custom_call.1']
    #allocation5 [shape = 'u8[6144]{0}', space=vmem, size = 0x1800, scoped, tag = 'input window, operand 1, single buffered']
    #allocation6 [shape = 's32[1]{0}', space=sflag, size = 0x4, scoped, tag = 'scoped memory for tpu_custom_call.1']
    #allocation7 [shape = 'u8[4096]{0}', space=vmem, size = 0x1000, scoped, tag = 'output window, operand 0, single buffered']
    %8 = vsyncpa [#allocation3], 0
    %9 = vsyncpa [#allocation6], 0
    %10 = vsyncpa [#allocation4], 0
    // Predicated region
    $region2: #{tpu_custom_call.1} parent=1 // pred_check
      _
    $region3: #{tpu_custom_call.1} parent=1 // pred_check_branch
      %12 = sbr.rel (0) target = $region5
    $region4: #{tpu_custom_call.1} parent=1 // pred_region
      %s14 = ssub.s32 64, 64
      %15 = vsyncadd [#allocation3], %s14
      %s17 = sshll.u32 [#allocation2], 4
      %s18 = int_to_ptr.vmem [resolvable:$true] %s17
      %20 = dma.hbm_to_vmem [thread:$0]  %s0, 64, %s18, [#allocation3]
    $region5: #{tpu_custom_call.1} parent=1 // pred_fallthru
      _
    // Predicated region
    $region6: #{tpu_custom_call.1} parent=1 // pred_check
      _
    $region7: #{tpu_custom_call.1} parent=1 // pred_check_branch
      %22 = sbr.rel (0) target = $region9
    $region8: #{tpu_custom_call.1} parent=1 // pred_region
      %s24 = ssub.s32 192, 192
      %25 = vsyncadd [#allocation6], %s24
      %s26 = sshll.u32 [#allocation5], 4
      %s27 = int_to_ptr.vmem [resolvable:$true] %s26
      %32 = dma.hbm_to_vmem [thread:$0]  %s1, 192, %s27, [#allocation6], 64, 64, 4
    $region9: #{tpu_custom_call.1} parent=1 // pred_fallthru
      _
    // Predicated region
    $region10: #{tpu_custom_call.1} parent=1 // pred_check
      _
    $region11: #{tpu_custom_call.1} parent=1 // pred_check_branch
      %34 = sbr.rel (0) target = $region13
    $region12: #{tpu_custom_call.1} parent=1 // pred_region
      _
    $region13: #{tpu_custom_call.1} parent=1 // pred_fallthru
      _
    // Predicated region
    $region14: #{tpu_custom_call.1} parent=1 // pred_check
      _
    $region15: #{tpu_custom_call.1} parent=1 // pred_check_branch
      %36 = sbr.rel (0) target = $region17
    $region16: #{tpu_custom_call.1} parent=1 // pred_region
      %37 = dma.done [#allocation3], 64
    $region17: #{tpu_custom_call.1} parent=1 // pred_fallthru
      _
    // Predicated region
    $region18: #{tpu_custom_call.1} parent=1 // pred_check
      _
    $region19: #{tpu_custom_call.1} parent=1 // pred_check_branch
      %39 = sbr.rel (0) target = $region21
    $region20: #{tpu_custom_call.1} parent=1 // pred_region
      %40 = dma.done [#allocation6], 192
    $region21: #{tpu_custom_call.1} parent=1 // pred_fallthru
      _
    %v42 = vld [vmem:[#allocation2] sm:$0xf]
    %v43 = vld [vmem:[#allocation5] sm:$0xf]
    %v44 = vld [vmem:[#allocation5 + $0x4] sm:$0xf]
    %v45 = vld [vmem:[#allocation5 + $0x8] sm:$0xf]
    %v49 = vunpack.c.l.b16 %v43
    %v50 = vunpack.c.l.b16 %v44
    %v51 = vunpack.c.l.b16 %v45
    %v52 = vpack.c.b16 %v50, %v49
    %v53 = vpack.c.b16 %v51, %v51
    %vm55 = vcmask 195584
    %v57 = vsel %vm55, %v42, 0
    %vm59 = vcmask 1043456
    %v61 = vsel %vm59, %v53, 0
    %63 = vmatprep.subr.bf16.mxu0 0
    %64 = vmatpush1.bf16.msra.mxu0 %v52
    %65 = vmatprep.subr.bf16.mxu0 0
    %66 = vmatpush1.bf16.msra.mxu0 %v61
    %67 = vmatprep.subr.bf16.mxu0 0
    %68 = vmatpush1.bf16.msra.mxu0 0
    %69 = vmatprep.subr.bf16.mxu0 0
    %70 = vmatpush1.bf16.msra.mxu0 0
    %71 = vmatprep.subr.bf16.mxu0 0
    %72 = vmatpush1.bf16.msra.mxu0 0
    %73 = vmatprep.subr.bf16.mxu0 0
    %74 = vmatpush1.bf16.msra.mxu0 0
    %75 = vmatprep.subr.bf16.mxu0 0
    %76 = vmatpush1.bf16.msra.mxu0 0
    %77 = vmatprep.subr.bf16.mxu0 0
    %78 = vmatpush1.bf16.msra.mxu0 0
    %79 = vmatprep.subr.bf16.mxu0 0
    %80 = vmatpush1.bf16.msra.mxu0 0
    %81 = vmatprep.subr.bf16.mxu0 0
    %82 = vmatpush1.bf16.msra.mxu0 0
    %83 = vmatprep.subr.bf16.mxu0 0
    %84 = vmatpush1.bf16.msra.mxu0 0
    %85 = vmatprep.subr.bf16.mxu0 0
    %86 = vmatpush1.bf16.msra.mxu0 0
    %87 = vmatprep.subr.bf16.mxu0 0
    %88 = vmatpush1.bf16.msra.mxu0 0
    %89 = vmatprep.subr.bf16.mxu0 0
    %90 = vmatpush1.bf16.msra.mxu0 0
    %91 = vmatprep.subr.bf16.mxu0 0
    %92 = vmatpush1.bf16.msra.mxu0 0
    %93 = vmatprep.subr.bf16.mxu0 0
    %94 = vmatpush1.bf16.msra.mxu0 0
    %95 = vmatprep.mubr.bf16.mxu0 0
    %96 = vmatmul.mubr.bf16.gmra.mrb[0].mxu0 %v57
    %v97 = vpop.f32.mrb[0].mxu0
    %v98 = vadd.f32 0.0, %v97
    %v99 = vpop.f32.mrb[0].mxu0
    %v100 = vpop.f32.mrb[0].mxu0
    %v101 = vpop.f32.mrb[0].mxu0
    %102 = vdwg.mxu0
    %v103 = vld [vmem:[%s2] sm:$0x1]
    %v105 = vlaneseq
    %v106 = vshrl.u32 %v105, 7
    %v107 = vsub.s32 0, %v106
    %v108 = vrot.slane %v103, %v107
    %vm110 = vcmp.eq.f32.partialorder %v98, %v108
    %v111 = vsel %vm110, 1, 0
    %v112 = vcvt.s32.f32 %v111
    %113 = vst [vmem:[#allocation7] sm:$0xff] %v112
    // Predicated region
    $region22: #{tpu_custom_call.1} parent=1 // pred_check
      _
    $region23: #{tpu_custom_call.1} parent=1 // pred_check_branch
      %115 = sbr.rel (0) target = $region25
    $region24: #{tpu_custom_call.1} parent=1 // pred_region
      %s117 = ssub.s32 128, 128
      %118 = vsyncadd [#allocation4], %s117
      %s120 = sshll.u32 [#allocation7], 4
      %s121 = int_to_ptr.vmem [resolvable:$true] %s120
      %123 = dma.vmem_to_hbm [thread:$0]  %s121, 128, %s3, [#allocation4]
    $region25: #{tpu_custom_call.1} parent=1 // pred_fallthru
      _
    // Predicated region
    $region26: #{tpu_custom_call.1} parent=1 // pred_check
      _
    $region27: #{tpu_custom_call.1} parent=1 // pred_check_branch
      %125 = sbr.rel (0) target = $region29
    $region28: #{tpu_custom_call.1} parent=1 // pred_region
      %126 = dma.done [#allocation4], 128
    $region29: #{tpu_custom_call.1} parent=1 // pred_fallthru
      _
    %127 = vsyncpa [#allocation3], 1
    %128 = vsyncpa [#allocation6], 1
    %129 = vsyncpa [#allocation4], 1

</llo_original>
